<compile_context>
chip_gen: v7x
topology: tpu7x:2x2x1
jax: 0.10.0
libtpu: 0.0.40
codegen_flags: <defaults>
</compile_context>

<pallas_src>
import functools

import jax
import jax.numpy as jnp
from jax.experimental import pallas as pl
from jax.experimental.pallas import tpu as pltpu


IN_FEATURES = 94
SET_FEATURES = 50
EXTRACTOR_HIDDEN = [50, 100]
REGRESSOR_HIDDEN = [100, 100, 50]


def _elu(x):
    # nn.ELU(alpha=1.0). exp lowers to the EUP (its own VLIW slot), so the
    # transcendental overlaps with MXU/VPU work. Keeps the dtype of x.
    one = jnp.asarray(1.0, x.dtype)
    return jnp.where(x > 0, x, jnp.exp(x) - one)


def deepset_kernel(
    x_ref,                                                      # (tb*S, 94) f32
    ew0_ref, eb0_ref, ew1_ref, eb1_ref, ew2_ref, eb2_ref,       # extractor
    rw0_ref, rb0_ref, rw1_ref, rb1_ref, rw2_ref, rb2_ref,       # regressor
    rw3_ref, rb3_ref,
    o_ref,                                                      # (tb, 1) f32
    *, set_size, act_dtype,
):
    rows, _f = x_ref.shape
    tb = rows // set_size

    # Single HBM pass for x: cast to bf16 here (not in the wrapper).
    x = x_ref[...].astype(ew0_ref.dtype)                        # bf16 (tb*S, 94)

    # ---- feature extractor (applied per set element) ----
    # MXU accumulates in f32; bias-add + ELU in act_dtype (bf16 on v6e/v7x,
    # f32 on v5e which has no bf16 VPU/EUP).
    h = jnp.dot(x, ew0_ref[...], preferred_element_type=jnp.float32)
    h = _elu(h.astype(act_dtype) + eb0_ref[...].astype(act_dtype))       # (tb*S, 50)
    h = jnp.dot(h.astype(ew1_ref.dtype), ew1_ref[...],
                preferred_element_type=jnp.float32)
    h = _elu(h.astype(act_dtype) + eb1_ref[...].astype(act_dtype))       # (tb*S, 100)

    # ---- aggregation hoisted before the last (linear) extractor layer ----
    # sum_s(h @ W2 + b2) == (sum_s h) @ W2 + S*b2   (exact; bias scaled by S).
    # Cast to f32 before the reshape so the (tb, S, 100) slab keeps the f32
    # (8,128) tiling (free when S % 8 == 0); sum accumulates in f32.
    hs = h.astype(jnp.float32).reshape(tb, set_size, -1)
    z = jnp.sum(hs, axis=1)                                              # (tb, 100) f32
    z = (jnp.dot(z.astype(ew2_ref.dtype), ew2_ref[...],
                 preferred_element_type=jnp.float32)
         + jnp.float32(set_size) * eb2_ref[...])                         # (tb, 50) f32

    # ---- regressor (tiny: tb rows; f32 elementwise) ----
    z = _elu(jnp.dot(z.astype(rw0_ref.dtype), rw0_ref[...],
                     preferred_element_type=jnp.float32) + rb0_ref[...])  # (tb, 100)
    z = _elu(jnp.dot(z.astype(rw1_ref.dtype), rw1_ref[...],
                     preferred_element_type=jnp.float32) + rb1_ref[...])  # (tb, 100)
    z = _elu(jnp.dot(z.astype(rw2_ref.dtype), rw2_ref[...],
                     preferred_element_type=jnp.float32) + rb2_ref[...])  # (tb, 50)
    z = jnp.dot(z.astype(rw3_ref.dtype), rw3_ref[...],
                preferred_element_type=jnp.float32) + rb3_ref[...]        # (tb, 1)

    o_ref[...] = z.astype(o_ref.dtype)


# ----------------------------- parameters -----------------------------------

def init_linear(key, fan_in, fan_out):
    """PyTorch-default-style init: U(-1/sqrt(fan_in), 1/sqrt(fan_in)).
    Weight stored as (in, out) so the kernel computes x @ W + b."""
    kw, kb = jax.random.split(key)
    bound = 1.0 / jnp.sqrt(jnp.float32(fan_in))
    w = jax.random.uniform(kw, (fan_in, fan_out), jnp.float32, -bound, bound)
    b = jax.random.uniform(kb, (1, fan_out), jnp.float32, -bound, bound)
    return w, b


def make_params(key):
    ext_dims = [IN_FEATURES] + EXTRACTOR_HIDDEN + [SET_FEATURES]   # 94,50,100,50
    reg_dims = [SET_FEATURES] + REGRESSOR_HIDDEN + [1]             # 50,100,100,50,1
    params = []
    for din, dout in zip(ext_dims[:-1], ext_dims[1:]):
        key, sub = jax.random.split(key)
        params.append(init_linear(sub, din, dout))
    for din, dout in zip(reg_dims[:-1], reg_dims[1:]):
        key, sub = jax.random.split(key)
        params.append(init_linear(sub, din, dout))
    return params   # [(ew0,eb0),(ew1,eb1),(ew2,eb2),(rw0,rb0),...,(rw3,rb3)]


def prep_params(params):
    """Weights -> bf16 (bf16 MXU operands, half the resident weight bytes);
    biases stay f32 (cast per-layer inside the kernel as needed)."""
    flat = []
    for w, b in params:
        flat.append(w.astype(jnp.bfloat16))
        flat.append(b.astype(jnp.float32))
    return flat


def _default_act_dtype():
    """bf16 elementwise (bias-add/ELU) only where the VPU/EUP support it."""
    try:
        kind = jax.devices()[0].device_kind.lower()
    except Exception:
        return jnp.float32
    if any(v in kind for v in ("v2", "v3", "v4", "v5")):
        return jnp.float32      # no bf16 VPU/EUP on these generations
    return jnp.bfloat16         # v6e / v7x


# ------------------------------- wrapper -------------------------------------

def deepset_forward(x, params, *, batch_tile=2048, act_dtype=None):
    B, S, F = x.shape
    if act_dtype is None:
        act_dtype = _default_act_dtype()

    tb = min(batch_tile, B)
    n_tiles = pl.cdiv(B, tb)           # partial last tile handled by masked edge blocks

    # No pad, no dtype pre-pass: x crosses HBM exactly once (read by the kernel).
    # Flatten to (B*S, F) in the wrapper (metadata-only reshape of the
    # contiguous HBM array) so the kernel sees a dense 2D block.
    x2d = x.reshape(B * S, F)
    flat = prep_params(params)

    kern = functools.partial(deepset_kernel, set_size=S, act_dtype=act_dtype)

    const2d = lambda i: (0, 0)         # weights/biases: VMEM-resident, fetched once
    in_specs = [pl.BlockSpec((tb * S, F), lambda i: (i, 0))]
    in_specs += [pl.BlockSpec(p.shape, const2d) for p in flat]

    out = pl.pallas_call(
        kern,
        out_shape=jax.ShapeDtypeStruct((n_tiles * tb, 1), jnp.float32),
        grid=(n_tiles,),
        in_specs=in_specs,
        out_specs=pl.BlockSpec((tb, 1), lambda i: (i, 0)),
        compiler_params=pltpu.CompilerParams(
            dimension_semantics=("parallel",),     # shard batch across TCs
            # 2-buffered f32 x block (~12 MiB at tb=2048, S=8) + bf16/f32 temps
            # stay well inside 48 MiB; also safe on v7x's 64 MiB per-TC VMEM.
            vmem_limit_bytes=48 * 1024 * 1024,
        ),
    )(x2d, *flat)
    return out[:B]


# ------------------------------ references -----------------------------------

def reference_matched(x, params, act_dtype):
    """Same math as the kernel (bf16 matmul operands, f32 MXU accumulation,
    act_dtype bias-add/ELU on the extractor, hoisted set-sum)."""
    B, S, F = x.shape
    (ew0, eb0, ew1, eb1, ew2, eb2,
     rw0, rb0, rw1, rb1, rw2, rb2, rw3, rb3) = prep_params(params)
    dot = functools.partial(jnp.dot, preferred_element_type=jnp.float32)
    bf = lambda a: a.astype(jnp.bfloat16)

    h = dot(bf(x).reshape(B * S, F), ew0)
    h = _elu(h.astype(act_dtype) + eb0.astype(act_dtype))
    h = dot(bf(h), ew1)
    h = _elu(h.astype(act_dtype) + eb1.astype(act_dtype))
    z = jnp.sum(h.astype(jnp.float32).reshape(B, S, -1), axis=1)
    z = dot(bf(z), ew2) + jnp.float32(S) * eb2
    z = _elu(dot(bf(z), rw0) + rb0)
    z = _elu(dot(bf(z), rw1) + rb1)
    z = _elu(dot(bf(z), rw2) + rb2)
    return dot(bf(z), rw3) + rb3


def reference_f32(x, params):
    """Original PyTorch-order semantics in full f32 (project every set element,
    then sum). Loose sanity check against bf16 rounding."""
    ((ew0, eb0), (ew1, eb1), (ew2, eb2),
     (rw0, rb0), (rw1, rb1), (rw2, rb2), (rw3, rb3)) = params
    h = _elu(jnp.einsum("bsf,fh->bsh", x, ew0) + eb0)
    h = _elu(jnp.einsum("bsf,fh->bsh", h, ew1) + eb1)
    h = jnp.einsum("bsf,fh->bsh", h, ew2) + eb2
    z = jnp.sum(h, axis=1)
    z = _elu(z @ rw0 + rb0)
    z = _elu(z @ rw1 + rb1)
    z = _elu(z @ rw2 + rb2)
    return z @ rw3 + rb3


if __name__ == "__main__":
    key = jax.random.PRNGKey(0)
    kx, kp = jax.random.split(key)

    B, S = 2, 8                     # small batch, small set size
    x = jax.random.normal(kx, (B, S, IN_FEATURES), jnp.float32)
    params = make_params(kp)
    act_dtype = _default_act_dtype()

    out = jax.block_until_ready(deepset_forward(x, params, act_dtype=act_dtype))
    assert out.shape == (B, 1), out.shape

    ref_bf16 = reference_matched(x, params, act_dtype)
    assert jnp.allclose(out, ref_bf16, atol=2e-2, rtol=2e-2), (out, ref_bf16)

    ref_f32 = reference_f32(x, params)
    assert jnp.allclose(out, ref_f32, atol=1e-1, rtol=1e-1), (out, ref_f32)

    print("KERNEL_OK")
</pallas_src>

<mosaic_0001>
module attributes {stable_mosaic.version = 11 : i64} {
  func.func @deepset_kernel(%arg0: i32, %arg1: memref<16x94xf32, #tpu.memory_space<vmem>>, %arg2: memref<94x50xbf16, #tpu.memory_space<vmem>>, %arg3: memref<1x50xf32, #tpu.memory_space<vmem>>, %arg4: memref<50x100xbf16, #tpu.memory_space<vmem>>, %arg5: memref<1x100xf32, #tpu.memory_space<vmem>>, %arg6: memref<100x50xbf16, #tpu.memory_space<vmem>>, %arg7: memref<1x50xf32, #tpu.memory_space<vmem>>, %arg8: memref<50x100xbf16, #tpu.memory_space<vmem>>, %arg9: memref<1x100xf32, #tpu.memory_space<vmem>>, %arg10: memref<100x100xbf16, #tpu.memory_space<vmem>>, %arg11: memref<1x100xf32, #tpu.memory_space<vmem>>, %arg12: memref<100x50xbf16, #tpu.memory_space<vmem>>, %arg13: memref<1x50xf32, #tpu.memory_space<vmem>>, %arg14: memref<50x1xbf16, #tpu.memory_space<vmem>>, %arg15: memref<1x1xf32, #tpu.memory_space<vmem>>, %arg16: memref<2x1xf32, #tpu.memory_space<vmem>>) attributes {dimension_semantics = [#tpu.dimension_semantics<parallel>], iteration_bounds = array<i64: 1>, scalar_prefetch = 0 : i64, scratch_operands = 0 : i64, tpu.core_type = #tpu.core_type<tc>, window_params = [{transform_indices = @transform_0, window_bounds = array<i64: 16, 94>}, {pipeline_mode = #tpu.pipeline_mode<synchronous>, transform_indices = @transform_1, window_bounds = array<i64: 94, 50>}, {pipeline_mode = #tpu.pipeline_mode<synchronous>, transform_indices = @transform_2, window_bounds = array<i64: 1, 50>}, {pipeline_mode = #tpu.pipeline_mode<synchronous>, transform_indices = @transform_3, window_bounds = array<i64: 50, 100>}, {pipeline_mode = #tpu.pipeline_mode<synchronous>, transform_indices = @transform_4, window_bounds = array<i64: 1, 100>}, {pipeline_mode = #tpu.pipeline_mode<synchronous>, transform_indices = @transform_5, window_bounds = array<i64: 100, 50>}, {pipeline_mode = #tpu.pipeline_mode<synchronous>, transform_indices = @transform_6, window_bounds = array<i64: 1, 50>}, {pipeline_mode = #tpu.pipeline_mode<synchronous>, transform_indices = @transform_7, window_bounds = array<i64: 50, 100>}, {pipeline_mode = #tpu.pipeline_mode<synchronous>, transform_indices = @transform_8, window_bounds = array<i64: 1, 100>}, {pipeline_mode = #tpu.pipeline_mode<synchronous>, transform_indices = @transform_9, window_bounds = array<i64: 100, 100>}, {pipeline_mode = #tpu.pipeline_mode<synchronous>, transform_indices = @transform_10, window_bounds = array<i64: 1, 100>}, {pipeline_mode = #tpu.pipeline_mode<synchronous>, transform_indices = @transform_11, window_bounds = array<i64: 100, 50>}, {pipeline_mode = #tpu.pipeline_mode<synchronous>, transform_indices = @transform_12, window_bounds = array<i64: 1, 50>}, {pipeline_mode = #tpu.pipeline_mode<synchronous>, transform_indices = @transform_13, window_bounds = array<i64: 50, 1>}, {pipeline_mode = #tpu.pipeline_mode<synchronous>, transform_indices = @transform_14, window_bounds = array<i64: 1, 1>}, {transform_indices = @transform_15, window_bounds = array<i64: 2, 1>}]} {
    %c0 = arith.constant 0 : index
    %c0_0 = arith.constant 0 : index
    %0 = vector.load %arg1[%c0, %c0_0] : memref<16x94xf32, #tpu.memory_space<vmem>>, vector<16x94xf32>
    %1 = arith.truncf %0 : vector<16x94xf32> to vector<16x94xbf16>
    %c0_1 = arith.constant 0 : index
    %c0_2 = arith.constant 0 : index
    %2 = vector.load %arg2[%c0_1, %c0_2] : memref<94x50xbf16, #tpu.memory_space<vmem>>, vector<94x50xbf16>
    %cst = arith.constant dense<0.000000e+00> : vector<16x50xf32>
    %3 = tpu.matmul %1, %2, %cst {dimension_numbers = #tpu.dot_dimension_numbers<[1], [0], [0], [1], [0, 0, 1, 1], [], []>} : vector<16x94xbf16>, vector<94x50xbf16>, vector<16x50xf32> -> vector<16x50xf32>
    %4 = arith.truncf %3 : vector<16x50xf32> to vector<16x50xbf16>
    %c0_3 = arith.constant 0 : index
    %c0_4 = arith.constant 0 : index
    %5 = vector.load %arg3[%c0_3, %c0_4] : memref<1x50xf32, #tpu.memory_space<vmem>>, vector<1x50xf32>
    %6 = arith.truncf %5 : vector<1x50xf32> to vector<1x50xbf16>
    %7 = vector.broadcast %6 : vector<1x50xbf16> to vector<16x50xbf16>
    %8 = arith.addf %4, %7 : vector<16x50xbf16>
    %cst_5 = arith.constant 0.000000e+00 : bf16
    %9 = vector.broadcast %cst_5 : bf16 to vector<16x50xbf16>
    %10 = arith.cmpf ogt, %8, %9 : vector<16x50xbf16>
    %11 = math.exp %8 : vector<16x50xbf16>
    %cst_6 = arith.constant 1.000000e+00 : bf16
    %12 = vector.broadcast %cst_6 : bf16 to vector<16x50xbf16>
    %13 = arith.subf %11, %12 : vector<16x50xbf16>
    %14 = arith.select %10, %8, %13 : vector<16x50xi1>, vector<16x50xbf16>
    %c0_7 = arith.constant 0 : index
    %c0_8 = arith.constant 0 : index
    %15 = vector.load %arg4[%c0_7, %c0_8] : memref<50x100xbf16, #tpu.memory_space<vmem>>, vector<50x100xbf16>
    %cst_9 = arith.constant dense<0.000000e+00> : vector<16x100xf32>
    %16 = tpu.matmul %14, %15, %cst_9 {dimension_numbers = #tpu.dot_dimension_numbers<[1], [0], [0], [1], [0, 0, 1, 1], [], []>} : vector<16x50xbf16>, vector<50x100xbf16>, vector<16x100xf32> -> vector<16x100xf32>
    %17 = arith.truncf %16 : vector<16x100xf32> to vector<16x100xbf16>
    %c0_10 = arith.constant 0 : index
    %c0_11 = arith.constant 0 : index
    %18 = vector.load %arg5[%c0_10, %c0_11] : memref<1x100xf32, #tpu.memory_space<vmem>>, vector<1x100xf32>
    %19 = arith.truncf %18 : vector<1x100xf32> to vector<1x100xbf16>
    %20 = vector.broadcast %19 : vector<1x100xbf16> to vector<16x100xbf16>
    %21 = arith.addf %17, %20 : vector<16x100xbf16>
    %cst_12 = arith.constant 0.000000e+00 : bf16
    %22 = vector.broadcast %cst_12 : bf16 to vector<16x100xbf16>
    %23 = arith.cmpf ogt, %21, %22 : vector<16x100xbf16>
    %24 = math.exp %21 : vector<16x100xbf16>
    %cst_13 = arith.constant 1.000000e+00 : bf16
    %25 = vector.broadcast %cst_13 : bf16 to vector<16x100xbf16>
    %26 = arith.subf %24, %25 : vector<16x100xbf16>
    %27 = arith.select %23, %21, %26 : vector<16x100xi1>, vector<16x100xbf16>
    %28 = arith.extf %27 : vector<16x100xbf16> to vector<16x100xf32>
    %29 = vector.shape_cast %28 : vector<16x100xf32> to vector<2x8x100xf32>
    %cst_14 = arith.constant dense<0.000000e+00> : vector<2x100xf32>
    %30 = vector.multi_reduction <add>, %29, %cst_14 [1] : vector<2x8x100xf32> to vector<2x100xf32>
    %31 = arith.truncf %30 : vector<2x100xf32> to vector<2x100xbf16>
    %c0_15 = arith.constant 0 : index
    %c0_16 = arith.constant 0 : index
    %32 = vector.load %arg6[%c0_15, %c0_16] : memref<100x50xbf16, #tpu.memory_space<vmem>>, vector<100x50xbf16>
    %cst_17 = arith.constant dense<0.000000e+00> : vector<2x50xf32>
    %33 = tpu.matmul %31, %32, %cst_17 {dimension_numbers = #tpu.dot_dimension_numbers<[1], [0], [0], [1], [0, 0, 1, 1], [], []>} : vector<2x100xbf16>, vector<100x50xbf16>, vector<2x50xf32> -> vector<2x50xf32>
    %c0_18 = arith.constant 0 : index
    %c0_19 = arith.constant 0 : index
    %34 = vector.load %arg7[%c0_18, %c0_19] : memref<1x50xf32, #tpu.memory_space<vmem>>, vector<1x50xf32>
    %cst_20 = arith.constant 8.000000e+00 : f32
    %35 = vector.broadcast %cst_20 : f32 to vector<1x50xf32>
    %36 = arith.mulf %35, %34 : vector<1x50xf32>
    %37 = vector.broadcast %36 : vector<1x50xf32> to vector<2x50xf32>
    %38 = arith.addf %33, %37 : vector<2x50xf32>
    %39 = arith.truncf %38 : vector<2x50xf32> to vector<2x50xbf16>
    %c0_21 = arith.constant 0 : index
    %c0_22 = arith.constant 0 : index
    %40 = vector.load %arg8[%c0_21, %c0_22] : memref<50x100xbf16, #tpu.memory_space<vmem>>, vector<50x100xbf16>
    %cst_23 = arith.constant dense<0.000000e+00> : vector<2x100xf32>
    %41 = tpu.matmul %39, %40, %cst_23 {dimension_numbers = #tpu.dot_dimension_numbers<[1], [0], [0], [1], [0, 0, 1, 1], [], []>} : vector<2x50xbf16>, vector<50x100xbf16>, vector<2x100xf32> -> vector<2x100xf32>
    %c0_24 = arith.constant 0 : index
    %c0_25 = arith.constant 0 : index
    %42 = vector.load %arg9[%c0_24, %c0_25] : memref<1x100xf32, #tpu.memory_space<vmem>>, vector<1x100xf32>
    %43 = vector.broadcast %42 : vector<1x100xf32> to vector<2x100xf32>
    %44 = arith.addf %41, %43 : vector<2x100xf32>
    %cst_26 = arith.constant 0.000000e+00 : f32
    %45 = vector.broadcast %cst_26 : f32 to vector<2x100xf32>
    %46 = arith.cmpf ogt, %44, %45 : vector<2x100xf32>
    %47 = math.exp %44 : vector<2x100xf32>
    %cst_27 = arith.constant 1.000000e+00 : f32
    %48 = vector.broadcast %cst_27 : f32 to vector<2x100xf32>
    %49 = arith.subf %47, %48 : vector<2x100xf32>
    %50 = arith.select %46, %44, %49 : vector<2x100xi1>, vector<2x100xf32>
    %51 = arith.truncf %50 : vector<2x100xf32> to vector<2x100xbf16>
    %c0_28 = arith.constant 0 : index
    %c0_29 = arith.constant 0 : index
    %52 = vector.load %arg10[%c0_28, %c0_29] : memref<100x100xbf16, #tpu.memory_space<vmem>>, vector<100x100xbf16>
    %cst_30 = arith.constant dense<0.000000e+00> : vector<2x100xf32>
    %53 = tpu.matmul %51, %52, %cst_30 {dimension_numbers = #tpu.dot_dimension_numbers<[1], [0], [0], [1], [0, 0, 1, 1], [], []>} : vector<2x100xbf16>, vector<100x100xbf16>, vector<2x100xf32> -> vector<2x100xf32>
    %c0_31 = arith.constant 0 : index
    %c0_32 = arith.constant 0 : index
    %54 = vector.load %arg11[%c0_31, %c0_32] : memref<1x100xf32, #tpu.memory_space<vmem>>, vector<1x100xf32>
    %55 = vector.broadcast %54 : vector<1x100xf32> to vector<2x100xf32>
    %56 = arith.addf %53, %55 : vector<2x100xf32>
    %cst_33 = arith.constant 0.000000e+00 : f32
    %57 = vector.broadcast %cst_33 : f32 to vector<2x100xf32>
    %58 = arith.cmpf ogt, %56, %57 : vector<2x100xf32>
    %59 = math.exp %56 : vector<2x100xf32>
    %cst_34 = arith.constant 1.000000e+00 : f32
    %60 = vector.broadcast %cst_34 : f32 to vector<2x100xf32>
    %61 = arith.subf %59, %60 : vector<2x100xf32>
    %62 = arith.select %58, %56, %61 : vector<2x100xi1>, vector<2x100xf32>
    %63 = arith.truncf %62 : vector<2x100xf32> to vector<2x100xbf16>
    %c0_35 = arith.constant 0 : index
    %c0_36 = arith.constant 0 : index
    %64 = vector.load %arg12[%c0_35, %c0_36] : memref<100x50xbf16, #tpu.memory_space<vmem>>, vector<100x50xbf16>
    %cst_37 = arith.constant dense<0.000000e+00> : vector<2x50xf32>
    %65 = tpu.matmul %63, %64, %cst_37 {dimension_numbers = #tpu.dot_dimension_numbers<[1], [0], [0], [1], [0, 0, 1, 1], [], []>} : vector<2x100xbf16>, vector<100x50xbf16>, vector<2x50xf32> -> vector<2x50xf32>
    %c0_38 = arith.constant 0 : index
    %c0_39 = arith.constant 0 : index
    %66 = vector.load %arg13[%c0_38, %c0_39] : memref<1x50xf32, #tpu.memory_space<vmem>>, vector<1x50xf32>
    %67 = vector.broadcast %66 : vector<1x50xf32> to vector<2x50xf32>
    %68 = arith.addf %65, %67 : vector<2x50xf32>
    %cst_40 = arith.constant 0.000000e+00 : f32
    %69 = vector.broadcast %cst_40 : f32 to vector<2x50xf32>
    %70 = arith.cmpf ogt, %68, %69 : vector<2x50xf32>
    %71 = math.exp %68 : vector<2x50xf32>
    %cst_41 = arith.constant 1.000000e+00 : f32
    %72 = vector.broadcast %cst_41 : f32 to vector<2x50xf32>
    %73 = arith.subf %71, %72 : vector<2x50xf32>
    %74 = arith.select %70, %68, %73 : vector<2x50xi1>, vector<2x50xf32>
    %75 = arith.truncf %74 : vector<2x50xf32> to vector<2x50xbf16>
    %c0_42 = arith.constant 0 : index
    %c0_43 = arith.constant 0 : index
    %76 = vector.load %arg14[%c0_42, %c0_43] : memref<50x1xbf16, #tpu.memory_space<vmem>>, vector<50x1xbf16>
    %cst_44 = arith.constant dense<0.000000e+00> : vector<2x1xf32>
    %77 = tpu.matmul %75, %76, %cst_44 {dimension_numbers = #tpu.dot_dimension_numbers<[1], [0], [0], [1], [0, 0, 1, 1], [], []>} : vector<2x50xbf16>, vector<50x1xbf16>, vector<2x1xf32> -> vector<2x1xf32>
    %c0_45 = arith.constant 0 : index
    %c0_46 = arith.constant 0 : index
    %78 = vector.load %arg15[%c0_45, %c0_46] : memref<1x1xf32, #tpu.memory_space<vmem>>, vector<1x1xf32>
    %79 = vector.broadcast %78 : vector<1x1xf32> to vector<2x1xf32>
    %80 = arith.addf %77, %79 : vector<2x1xf32>
    %c0_47 = arith.constant 0 : index
    %c0_48 = arith.constant 0 : index
    %81 = vector.load %arg16[%c0_47, %c0_48] : memref<2x1xf32, #tpu.memory_space<vmem>>, vector<2x1xf32>
    tpu.vector_store %arg16[%c0_47, %c0_48], %80 {strides = array<i32>} : memref<2x1xf32, #tpu.memory_space<vmem>>, vector<2x1xf32>,
    return
  }
  func.func @transform_0(%arg0: i32) -> (i32, i32) {
    %c0_i32 = arith.constant 0 : i32
    %c0_i32_0 = arith.constant 0 : i32
    return %arg0, %c0_i32 : i32, i32
  }
  func.func @transform_1(%arg0: i32) -> (i32, i32) {
    %c0_i32 = arith.constant 0 : i32
    %c0_i32_0 = arith.constant 0 : i32
    %c0_i32_1 = arith.constant 0 : i32
    return %c0_i32, %c0_i32_0 : i32, i32
  }
  func.func @transform_2(%arg0: i32) -> (i32, i32) {
    %c0_i32 = arith.constant 0 : i32
    %c0_i32_0 = arith.constant 0 : i32
    %c0_i32_1 = arith.constant 0 : i32
    return %c0_i32, %c0_i32_0 : i32, i32
  }
  func.func @transform_3(%arg0: i32) -> (i32, i32) {
    %c0_i32 = arith.constant 0 : i32
    %c0_i32_0 = arith.constant 0 : i32
    %c0_i32_1 = arith.constant 0 : i32
    return %c0_i32, %c0_i32_0 : i32, i32
  }
  func.func @transform_4(%arg0: i32) -> (i32, i32) {
    %c0_i32 = arith.constant 0 : i32
    %c0_i32_0 = arith.constant 0 : i32
    %c0_i32_1 = arith.constant 0 : i32
    return %c0_i32, %c0_i32_0 : i32, i32
  }
  func.func @transform_5(%arg0: i32) -> (i32, i32) {
    %c0_i32 = arith.constant 0 : i32
    %c0_i32_0 = arith.constant 0 : i32
    %c0_i32_1 = arith.constant 0 : i32
    return %c0_i32, %c0_i32_0 : i32, i32
  }
  func.func @transform_6(%arg0: i32) -> (i32, i32) {
    %c0_i32 = arith.constant 0 : i32
    %c0_i32_0 = arith.constant 0 : i32
    %c0_i32_1 = arith.constant 0 : i32
    return %c0_i32, %c0_i32_0 : i32, i32
  }
  func.func @transform_7(%arg0: i32) -> (i32, i32) {
    %c0_i32 = arith.constant 0 : i32
    %c0_i32_0 = arith.constant 0 : i32
    %c0_i32_1 = arith.constant 0 : i32
    return %c0_i32, %c0_i32_0 : i32, i32
  }
  func.func @transform_8(%arg0: i32) -> (i32, i32) {
    %c0_i32 = arith.constant 0 : i32
    %c0_i32_0 = arith.constant 0 : i32
    %c0_i32_1 = arith.constant 0 : i32
    return %c0_i32, %c0_i32_0 : i32, i32
  }
  func.func @transform_9(%arg0: i32) -> (i32, i32) {
    %c0_i32 = arith.constant 0 : i32
    %c0_i32_0 = arith.constant 0 : i32
    %c0_i32_1 = arith.constant 0 : i32
    return %c0_i32, %c0_i32_0 : i32, i32
  }
  func.func @transform_10(%arg0: i32) -> (i32, i32) {
    %c0_i32 = arith.constant 0 : i32
    %c0_i32_0 = arith.constant 0 : i32
    %c0_i32_1 = arith.constant 0 : i32
    return %c0_i32, %c0_i32_0 : i32, i32
  }
  func.func @transform_11(%arg0: i32) -> (i32, i32) {
    %c0_i32 = arith.constant 0 : i32
    %c0_i32_0 = arith.constant 0 : i32
    %c0_i32_1 = arith.constant 0 : i32
    return %c0_i32, %c0_i32_0 : i32, i32
  }
  func.func @transform_12(%arg0: i32) -> (i32, i32) {
    %c0_i32 = arith.constant 0 : i32
    %c0_i32_0 = arith.constant 0 : i32
    %c0_i32_1 = arith.constant 0 : i32
    return %c0_i32, %c0_i32_0 : i32, i32
  }
  func.func @transform_13(%arg0: i32) -> (i32, i32) {
    %c0_i32 = arith.constant 0 : i32
    %c0_i32_0 = arith.constant 0 : i32
    %c0_i32_1 = arith.constant 0 : i32
    return %c0_i32, %c0_i32_0 : i32, i32
  }
  func.func @transform_14(%arg0: i32) -> (i32, i32) {
    %c0_i32 = arith.constant 0 : i32
    %c0_i32_0 = arith.constant 0 : i32
    %c0_i32_1 = arith.constant 0 : i32
    return %c0_i32, %c0_i32_0 : i32, i32
  }
  func.func @transform_15(%arg0: i32) -> (i32, i32) {
    %c0_i32 = arith.constant 0 : i32
    %c0_i32_0 = arith.constant 0 : i32
    return %arg0, %c0_i32 : i32, i32
  }
}

</mosaic_0001>

<llo_original>
// kernel: tpu_custom_call.1
$region0: #{tpu_custom_call.1}
  #allocation0 [shape = 'u32[]', space=smem, size = 0x4, offset = 0x4, fixed_abs, tag = 'smem constant byte address 0x4 - core index']
  #allocation1 [shape = 'u32[144,128]{1,0:T(1,128)}', space=vmem, size = 0x12000, scoped, tag = 'internal scratch']
  #allocation2 [shape = 'f32[1,1]{1,0:T(1,128)S(1)}', space=vmem, size = 0x200, scoped, tag = 'scoped memory for tpu_custom_call.1']
  %s0 = inlined_call_operand.vmem [shape: f32[16,94], index: 0, kind: input, shape index: {}]
  %s1 = inlined_call_operand.vmem [shape: bf16[94,50], index: 1, kind: input, shape index: {}]
  %s2 = inlined_call_operand.vmem [shape: f32[1,50], index: 2, kind: input, shape index: {}]
  %s3 = inlined_call_operand.vmem [shape: bf16[50,100], index: 3, kind: input, shape index: {}]
  %s4 = inlined_call_operand.vmem [shape: f32[1,100], index: 4, kind: input, shape index: {}]
  %s5 = inlined_call_operand.vmem [shape: bf16[100,50], index: 5, kind: input, shape index: {}]
  %s6 = inlined_call_operand.vmem [shape: f32[1,50], index: 6, kind: input, shape index: {}]
  %s7 = inlined_call_operand.vmem [shape: bf16[50,100], index: 7, kind: input, shape index: {}]
  %s8 = inlined_call_operand.vmem [shape: f32[1,100], index: 8, kind: input, shape index: {}]
  %s9 = inlined_call_operand.vmem [shape: bf16[100,100], index: 9, kind: input, shape index: {}]
  %s10 = inlined_call_operand.vmem [shape: f32[1,100], index: 10, kind: input, shape index: {}]
  %s11 = inlined_call_operand.vmem [shape: bf16[100,50], index: 11, kind: input, shape index: {}]
  %s12 = inlined_call_operand.vmem [shape: f32[1,50], index: 12, kind: input, shape index: {}]
  %s13 = inlined_call_operand.vmem [shape: bf16[50,1], index: 13, kind: input, shape index: {}]
  %s14 = inlined_call_operand.<no memory space> [shape: f32[1,1], index: 14, kind: input, shape index: {}]
  %s15 = inlined_call_operand.vmem [shape: f32[2,1], index: 15, kind: output, shape index: {}]
  %s16 = sld [smem:[#allocation0]]
  $region70: #{tpu_custom_call.1} parent=0
    _
  %s18 = ssub.s32 1, %s16
  %s19 = scalar_select 0, %s18, %s16
  %v20 = vstv %s14
  %21 = vst [vmem:[#allocation2] sm:$0x1] %v20
  // Predicated region
  $region2: #{tpu_custom_call.1} parent=0 // pred_check
    _
  $region3: #{tpu_custom_call.1} parent=0 // pred_check_branch
    %23 = sbr.rel (0) target = $region5
  $region4: #{tpu_custom_call.1} parent=0 // pred_region
    _
  $region5: #{tpu_custom_call.1} parent=0 // pred_fallthru
    _
  // Predicated region
  $region6: #{tpu_custom_call.1} parent=0 // pred_check
    _
  $region7: #{tpu_custom_call.1} parent=0 // pred_check_branch
    %25 = sbr.rel (0) target = $region9
  $region8: #{tpu_custom_call.1} parent=0 // pred_region
    _
  $region9: #{tpu_custom_call.1} parent=0 // pred_fallthru
    _
  // Predicated region
  $region10: #{tpu_custom_call.1} parent=0 // pred_check
    _
  $region11: #{tpu_custom_call.1} parent=0 // pred_check_branch
    %27 = sbr.rel (0) target = $region13
  $region12: #{tpu_custom_call.1} parent=0 // pred_region
    _
  $region13: #{tpu_custom_call.1} parent=0 // pred_fallthru
    _
  // Predicated region
  $region14: #{tpu_custom_call.1} parent=0 // pred_check
    _
  $region15: #{tpu_custom_call.1} parent=0 // pred_check_branch
    %29 = sbr.rel (0) target = $region17
  $region16: #{tpu_custom_call.1} parent=0 // pred_region
    _
  $region17: #{tpu_custom_call.1} parent=0 // pred_fallthru
    _
  // Predicated region
  $region18: #{tpu_custom_call.1} parent=0 // pred_check
    _
  $region19: #{tpu_custom_call.1} parent=0 // pred_check_branch
    %31 = sbr.rel (0) target = $region21
  $region20: #{tpu_custom_call.1} parent=0 // pred_region
    _
  $region21: #{tpu_custom_call.1} parent=0 // pred_fallthru
    _
  // Predicated region
  $region22: #{tpu_custom_call.1} parent=0 // pred_check
    _
  $region23: #{tpu_custom_call.1} parent=0 // pred_check_branch
    %33 = sbr.rel (0) target = $region25
  $region24: #{tpu_custom_call.1} parent=0 // pred_region
    _
  $region25: #{tpu_custom_call.1} parent=0 // pred_fallthru
    _
  // Predicated region
  $region26: #{tpu_custom_call.1} parent=0 // pred_check
    _
  $region27: #{tpu_custom_call.1} parent=0 // pred_check_branch
    %35 = sbr.rel (0) target = $region29
  $region28: #{tpu_custom_call.1} parent=0 // pred_region
    _
  $region29: #{tpu_custom_call.1} parent=0 // pred_fallthru
    _
  // Predicated region
  $region30: #{tpu_custom_call.1} parent=0 // pred_check
    _
  $region31: #{tpu_custom_call.1} parent=0 // pred_check_branch
    %37 = sbr.rel (0) target = $region33
  $region32: #{tpu_custom_call.1} parent=0 // pred_region
    _
  $region33: #{tpu_custom_call.1} parent=0 // pred_fallthru
    _
  // Predicated region
  $region34: #{tpu_custom_call.1} parent=0 // pred_check
    _
  $region35: #{tpu_custom_call.1} parent=0 // pred_check_branch
    %39 = sbr.rel (0) target = $region37
  $region36: #{tpu_custom_call.1} parent=0 // pred_region
    _
  $region37: #{tpu_custom_call.1} parent=0 // pred_fallthru
    _
  // Predicated region
  $region38: #{tpu_custom_call.1} parent=0 // pred_check
    _
  $region39: #{tpu_custom_call.1} parent=0 // pred_check_branch
    %41 = sbr.rel (0) target = $region41
  $region40: #{tpu_custom_call.1} parent=0 // pred_region
    _
  $region41: #{tpu_custom_call.1} parent=0 // pred_fallthru
    _
  // Predicated region
  $region42: #{tpu_custom_call.1} parent=0 // pred_check
    _
  $region43: #{tpu_custom_call.1} parent=0 // pred_check_branch
    %43 = sbr.rel (0) target = $region45
  $region44: #{tpu_custom_call.1} parent=0 // pred_region
    _
  $region45: #{tpu_custom_call.1} parent=0 // pred_fallthru
    _
  // Predicated region
  $region46: #{tpu_custom_call.1} parent=0 // pred_check
    _
  $region47: #{tpu_custom_call.1} parent=0 // pred_check_branch
    %45 = sbr.rel (0) target = $region49
  $region48: #{tpu_custom_call.1} parent=0 // pred_region
    _
  $region49: #{tpu_custom_call.1} parent=0 // pred_fallthru
    _
  // Predicated region
  $region50: #{tpu_custom_call.1} parent=0 // pred_check
    _
  $region51: #{tpu_custom_call.1} parent=0 // pred_check_branch
    %47 = sbr.rel (0) target = $region53
  $region52: #{tpu_custom_call.1} parent=0 // pred_region
    _
  $region53: #{tpu_custom_call.1} parent=0 // pred_fallthru
    _
  // Predicated region
  $region54: #{tpu_custom_call.1} parent=0 // pred_check
    _
  $region55: #{tpu_custom_call.1} parent=0 // pred_check_branch
    %49 = sbr.rel (0) target = $region57
  $region56: #{tpu_custom_call.1} parent=0 // pred_region
    _
  $region57: #{tpu_custom_call.1} parent=0 // pred_fallthru
    _
  // Predicated region
  $region58: #{tpu_custom_call.1} parent=0 // pred_check
    _
  $region59: #{tpu_custom_call.1} parent=0 // pred_check_branch
    %51 = sbr.rel (0) target = $region61
  $region60: #{tpu_custom_call.1} parent=0 // pred_region
    _
  $region61: #{tpu_custom_call.1} parent=0 // pred_fallthru
    _
  %v54 = vld [vmem:[%s0] sm:$0xff]
  %v55 = vld [vmem:[%s0 + $0x8] sm:$0xff]
  %v56 = vpack.c.bf16 %v55, %v54
  %v57 = vld [vmem:[%s1] sm:$0xf]
  %v58 = vld [vmem:[%s1 + $0x4] sm:$0xf]
  %v59 = vld [vmem:[%s1 + $0x8] sm:$0xf]
  %v60 = vld [vmem:[%s1 + $0xc] sm:$0xf]
  %v61 = vld [vmem:[%s1 + $0x10] sm:$0xf]
  %v62 = vld [vmem:[%s1 + $0x14] sm:$0xf]
  %v63 = vld [vmem:[%s1 + $0x18] sm:$0xf]
  %v64 = vld [vmem:[%s1 + $0x1c] sm:$0xf]
  %v65 = vld [vmem:[%s1 + $0x20] sm:$0xf]
  %v66 = vld [vmem:[%s1 + $0x24] sm:$0xf]
  %v67 = vld [vmem:[%s1 + $0x28] sm:$0xf]
  %v68 = vld [vmem:[%s1 + $0x2c] sm:$0x7]
  %v81 = vunpack.c.l.b16 %v57
  %v82 = vunpack.c.l.b16 %v58
  %v83 = vunpack.c.l.b16 %v59
  %v84 = vunpack.c.l.b16 %v60
  %v85 = vunpack.c.l.b16 %v61
  %v86 = vunpack.c.l.b16 %v62
  %v87 = vunpack.c.l.b16 %v63
  %v88 = vunpack.c.l.b16 %v64
  %v89 = vunpack.c.l.b16 %v65
  %v90 = vunpack.c.l.b16 %v66
  %v91 = vunpack.c.l.b16 %v67
  %v92 = vunpack.c.l.b16 %v68
  %v93 = vpack.c.b16 %v82, %v81
  %v94 = vpack.c.b16 %v84, %v83
  %v95 = vpack.c.b16 %v86, %v85
  %v96 = vpack.c.b16 %v88, %v87
  %v97 = vpack.c.b16 %v90, %v89
  %v98 = vpack.c.b16 %v92, %v91
  %vm104 = vcmask 769024
  %v106 = vsel %vm104, %v56, 0
  %vm108 = vcmask 1046528
  %v110 = vsel %vm108, %v98, 0
  %112 = vmatprep.subr.bf16.mxu0 0
  %113 = vmatpush1.bf16.msra.mxu0 %v93
  %114 = vmatprep.subr.bf16.mxu0 0
  %115 = vmatpush1.bf16.msra.mxu0 %v94
  %116 = vmatprep.subr.bf16.mxu0 0
  %117 = vmatpush1.bf16.msra.mxu0 %v95
  %118 = vmatprep.subr.bf16.mxu0 0
  %119 = vmatpush1.bf16.msra.mxu0 %v96
  %120 = vmatprep.subr.bf16.mxu0 0
  %121 = vmatpush1.bf16.msra.mxu0 %v97
  %122 = vmatprep.subr.bf16.mxu0 0
  %123 = vmatpush1.bf16.msra.mxu0 %v110
  %124 = vmatprep.subr.bf16.mxu0 0
  %125 = vmatpush1.bf16.msra.mxu0 0
  %126 = vmatprep.subr.bf16.mxu0 0
  %127 = vmatpush1.bf16.msra.mxu0 0
  %128 = vmatprep.subr.bf16.mxu0 0
  %129 = vmatpush1.bf16.msra.mxu0 0
  %130 = vmatprep.subr.bf16.mxu0 0
  %131 = vmatpush1.bf16.msra.mxu0 0
  %132 = vmatprep.subr.bf16.mxu0 0
  %133 = vmatpush1.bf16.msra.mxu0 0
  %134 = vmatprep.subr.bf16.mxu0 0
  %135 = vmatpush1.bf16.msra.mxu0 0
  %136 = vmatprep.subr.bf16.mxu0 0
  %137 = vmatpush1.bf16.msra.mxu0 0
  %138 = vmatprep.subr.bf16.mxu0 0
  %139 = vmatpush1.bf16.msra.mxu0 0
  %140 = vmatprep.subr.bf16.mxu0 0
  %141 = vmatpush1.bf16.msra.mxu0 0
  %142 = vmatprep.subr.bf16.mxu0 0
  %143 = vmatpush1.bf16.msra.mxu0 0
  %144 = vmatprep.mubr.bf16.mxu0 0
  %145 = vmatmul.mubr.bf16.gmra.mrb[0].mxu0 %v106
  %v146 = vpop.f32.mrb[0].mxu0
  %v147 = vadd.f32 0.0, %v146
  %v148 = vpop.f32.mrb[0].mxu0
  %v149 = vpop.f32.mrb[0].mxu0
  %v150 = vadd.f32 0.0, %v149
  %v151 = vpop.f32.mrb[0].mxu0
  %152 = vdwg.mxu0
  %v153 = vpack.c.bf16 %v150, %v147
  %v154 = vld [vmem:[%s2] sm:$0x1]
  %v155 = vpack.c.bf16 %v154, %v154
  %v157 = vpack.i.b16 %v155, %v155
  %v159 = vlaneseq
  %v160 = vshrl.u32 %v159, 7
  %v161 = vsub.s32 0, %v160
  %v162 = vrot.slane %v157, %v161
  %v163 = vadd.bf16 %v153, %v162
  %vm164 = vcmp.gt.bf16.partialorder %v163, 0
  %v166 = vmul.bf16 %v163, 1069105081
  %v167 = vpow.bf16.pop %v166
  %v168 = vsub.bf16 %v167, 1065369472
  %v169 = vsel %vm164, %v163, %v168
  %v170 = vld [vmem:[%s3] sm:$0xf]
  %v171 = vld [vmem:[%s3 + $0x4] sm:$0xf]
  %v172 = vld [vmem:[%s3 + $0x8] sm:$0xf]
  %v173 = vld [vmem:[%s3 + $0xc] sm:$0xf]
  %v174 = vld [vmem:[%s3 + $0x10] sm:$0xf]
  %v175 = vld [vmem:[%s3 + $0x14] sm:$0xf]
  %v176 = vld [vmem:[%s3 + $0x18] sm:$0x1]
  %v184 = vunpack.c.l.b16 %v170
  %v185 = vunpack.c.l.b16 %v171
  %v186 = vunpack.c.l.b16 %v172
  %v187 = vunpack.c.l.b16 %v173
  %v188 = vunpack.c.l.b16 %v174
  %v189 = vunpack.c.l.b16 %v175
  %v190 = vunpack.c.l.b16 %v176
  %v191 = vpack.c.b16 %v185, %v184
  %v192 = vpack.c.b16 %v187, %v186
  %v193 = vpack.c.b16 %v189, %v188
  %v194 = vpack.c.b16 %v190, %v190
  %vm198 = vcmask 408576
  %v200 = vsel %vm198, %v169, 0
  %vm202 = vcmask 1040384
  %v204 = vsel %vm202, %v194, 0
  %206 = vmatprep.subr.bf16.mxu0 0
  %207 = vmatpush1.bf16.msra.mxu0 %v191
  %208 = vmatprep.subr.bf16.mxu0 0
  %209 = vmatpush1.bf16.msra.mxu0 %v192
  %210 = vmatprep.subr.bf16.mxu0 0
  %211 = vmatpush1.bf16.msra.mxu0 %v193
  %212 = vmatprep.subr.bf16.mxu0 0
  %213 = vmatpush1.bf16.msra.mxu0 %v204
  %214 = vmatprep.subr.bf16.mxu0 0
  %215 = vmatpush1.bf16.msra.mxu0 0
  %216 = vmatprep.subr.bf16.mxu0 0
  %217 = vmatpush1.bf16.msra.mxu0 0
  %218 = vmatprep.subr.bf16.mxu0 0
  %219 = vmatpush1.bf16.msra.mxu0 0
  %220 = vmatprep.subr.bf16.mxu0 0
  %221 = vmatpush1.bf16.msra.mxu0 0
  %222 = vmatprep.subr.bf16.mxu0 0
  %223 = vmatpush1.bf16.msra.mxu0 0
  %224 = vmatprep.subr.bf16.mxu0 0
  %225 = vmatpush1.bf16.msra.mxu0 0
  %226 = vmatprep.subr.bf16.mxu0 0
  %227 = vmatpush1.bf16.msra.mxu0 0
  %228 = vmatprep.subr.bf16.mxu0 0
  %229 = vmatpush1.bf16.msra.mxu0 0
  %230 = vmatprep.subr.bf16.mxu0 0
  %231 = vmatpush1.bf16.msra.mxu0 0
  %232 = vmatprep.subr.bf16.mxu0 0
  %233 = vmatpush1.bf16.msra.mxu0 0
  %234 = vmatprep.subr.bf16.mxu0 0
  %235 = vmatpush1.bf16.msra.mxu0 0
  %236 = vmatprep.subr.bf16.mxu0 0
  %237 = vmatpush1.bf16.msra.mxu0 0
  %238 = vmatprep.mubr.bf16.mxu0 0
  %239 = vmatmul.mubr.bf16.gmra.mrb[0].mxu0 %v200
  %v240 = vpop.f32.mrb[0].mxu0
  %v241 = vadd.f32 0.0, %v240
  %v242 = vpop.f32.mrb[0].mxu0
  %v243 = vpop.f32.mrb[0].mxu0
  %v244 = vadd.f32 0.0, %v243
  %v245 = vpop.f32.mrb[0].mxu0
  %246 = vdwg.mxu0
  %v247 = vpack.c.bf16 %v244, %v241
  %v248 = vld [vmem:[%s4] sm:$0x1]
  %v249 = vpack.c.bf16 %v248, %v248
  %v251 = vpack.i.b16 %v249, %v249
  %v253 = vlaneseq
  %v254 = vshrl.u32 %v253, 7
  %v255 = vsub.s32 0, %v254
  %v256 = vrot.slane %v251, %v255
  %v257 = vadd.bf16 %v247, %v256
  %vm258 = vcmp.gt.bf16.partialorder %v257, 0
  %v260 = vmul.bf16 %v257, 1069105081
  %v261 = vpow.bf16.pop %v260
  %v262 = vsub.bf16 %v261, 1065369472
  %v263 = vsel %vm258, %v257, %v262
  %v264 = vunpack.c.l.bf16 %v263
  %v265 = vunpack.c.h.bf16 %v263
  %vm266 = vcmask 818176
  %v267 = vsel %vm266, %v264, 0.0
  %v268 = vrot.slane %v267, 4
  %v269 = vadd.f32 %v267, %v268
  %v270 = vrot.slane %v269, 2
  %v271 = vadd.f32 %v269, %v270
  %v272 = vrot.slane %v271, 1
  %v273 = vadd.f32 %v271, %v272
  %v274 = vsel %vm266, %v265, 0.0
  %v275 = vrot.slane %v274, 4
  %v276 = vadd.f32 %v274, %v275
  %v277 = vrot.slane %v276, 2
  %v278 = vadd.f32 %v276, %v277
  %v279 = vrot.slane %v278, 1
  %v280 = vadd.f32 %v278, %v279
  %v281 = vpack.c.bf16 %v273, %v273
  %v282 = vpack.c.bf16 %v280, %v280
  %v283 = vld [vmem:[%s5] sm:$0xf]
  %v284 = vld [vmem:[%s5 + $0x4] sm:$0xf]
  %v285 = vld [vmem:[%s5 + $0x8] sm:$0xf]
  %v286 = vld [vmem:[%s5 + $0xc] sm:$0xf]
  %v287 = vld [vmem:[%s5 + $0x10] sm:$0xf]
  %v288 = vld [vmem:[%s5 + $0x14] sm:$0xf]
  %v289 = vld [vmem:[%s5 + $0x18] sm:$0xf]
  %v290 = vld [vmem:[%s5 + $0x1c] sm:$0xf]
  %v291 = vld [vmem:[%s5 + $0x20] sm:$0xf]
  %v292 = vld [vmem:[%s5 + $0x24] sm:$0xf]
  %v293 = vld [vmem:[%s5 + $0x28] sm:$0xf]
  %v294 = vld [vmem:[%s5 + $0x2c] sm:$0xf]
  %v295 = vld [vmem:[%s5 + $0x30] sm:$0x3]
  %v296 = vld [vmem:[%s6] sm:$0x1]
  %v297 = vmul.f32 %v296, 8.0
  %v299 = vlaneseq
  %v300 = vshrl.u32 %v299, 7
  %v301 = vsub.s32 0, %v300
  %v302 = vrot.slane %v297, %v301
  %v306 = vunpack.c.l.b16 %v281
  %v307 = vunpack.c.l.b16 %v282
  %vm308 = vcmask 1041409
  %v309 = vsel %vm308, %v307, %v306
  %v310 = vpack.c.b16 %v309, %v309
  %v324 = vunpack.c.l.b16 %v283
  %v325 = vunpack.c.l.b16 %v284
  %v326 = vunpack.c.l.b16 %v285
  %v327 = vunpack.c.l.b16 %v286
  %v328 = vunpack.c.l.b16 %v287
  %v329 = vunpack.c.l.b16 %v288
  %v330 = vunpack.c.l.b16 %v289
  %v331 = vunpack.c.l.b16 %v290
  %v332 = vunpack.c.l.b16 %v291
  %v333 = vunpack.c.l.b16 %v292
  %v334 = vunpack.c.l.b16 %v293
  %v335 = vunpack.c.l.b16 %v294
  %v336 = vunpack.c.l.b16 %v295
  %v337 = vpack.c.b16 %v325, %v324
  %v338 = vpack.c.b16 %v327, %v326
  %v339 = vpack.c.b16 %v329, %v328
  %v340 = vpack.c.b16 %v331, %v330
  %v341 = vpack.c.b16 %v333, %v332
  %v342 = vpack.c.b16 %v335, %v334
  %v343 = vpack.c.b16 %v336, %v336
  %v351 = vsel %vm266, %v310, 0
  %vm353 = vcmask 1041408
  %v355 = vsel %vm353, %v343, 0
  %357 = vmatprep.subr.bf16.mxu0 0
  %358 = vmatpush1.bf16.msra.mxu0 %v337
  %359 = vmatprep.subr.bf16.mxu0 0
  %360 = vmatpush1.bf16.msra.mxu0 %v338
  %361 = vmatprep.subr.bf16.mxu0 0
  %362 = vmatpush1.bf16.msra.mxu0 %v339
  %363 = vmatprep.subr.bf16.mxu0 0
  %364 = vmatpush1.bf16.msra.mxu0 %v340
  %365 = vmatprep.subr.bf16.mxu0 0
  %366 = vmatpush1.bf16.msra.mxu0 %v341
  %367 = vmatprep.subr.bf16.mxu0 0
  %368 = vmatpush1.bf16.msra.mxu0 %v342
  %369 = vmatprep.subr.bf16.mxu0 0
  %370 = vmatpush1.bf16.msra.mxu0 %v355
  %371 = vmatprep.subr.bf16.mxu0 0
  %372 = vmatpush1.bf16.msra.mxu0 0
  %373 = vmatprep.subr.bf16.mxu0 0
  %374 = vmatpush1.bf16.msra.mxu0 0
  %375 = vmatprep.subr.bf16.mxu0 0
  %376 = vmatpush1.bf16.msra.mxu0 0
  %377 = vmatprep.subr.bf16.mxu0 0
  %378 = vmatpush1.bf16.msra.mxu0 0
  %379 = vmatprep.subr.bf16.mxu0 0
  %380 = vmatpush1.bf16.msra.mxu0 0
  %381 = vmatprep.subr.bf16.mxu0 0
  %382 = vmatpush1.bf16.msra.mxu0 0
  %383 = vmatprep.subr.bf16.mxu0 0
  %384 = vmatpush1.bf16.msra.mxu0 0
  %385 = vmatprep.subr.bf16.mxu0 0
  %386 = vmatpush1.bf16.msra.mxu0 0
  %387 = vmatprep.subr.bf16.mxu0 0
  %388 = vmatpush1.bf16.msra.mxu0 0
  %389 = vmatprep.mubr.bf16.mxu0 0
  %390 = vmatmul.mubr.bf16.gmra.mrb[0].mxu0 %v351
  %v391 = vpop.f32.mrb[0].mxu0
  %v392 = vadd.f32 %v302, %v391
  %v393 = vpop.f32.mrb[0].mxu0
  %v394 = vpop.f32.mrb[0].mxu0
  %v395 = vpop.f32.mrb[0].mxu0
  %396 = vdwg.mxu0
  %v397 = vpack.c.bf16 %v392, %v392
  %v398 = vld [vmem:[%s7] sm:$0xf]
  %v399 = vld [vmem:[%s7 + $0x4] sm:$0xf]
  %v400 = vld [vmem:[%s7 + $0x8] sm:$0xf]
  %v401 = vld [vmem:[%s7 + $0xc] sm:$0xf]
  %v402 = vld [vmem:[%s7 + $0x10] sm:$0xf]
  %v403 = vld [vmem:[%s7 + $0x14] sm:$0xf]
  %v404 = vld [vmem:[%s7 + $0x18] sm:$0x1]
  %v405 = vld [vmem:[%s8] sm:$0x1]
  %v407 = vlaneseq
  %v408 = vshrl.u32 %v407, 7
  %v409 = vsub.s32 0, %v408
  %v410 = vrot.slane %v405, %v409
  %v419 = vunpack.c.l.b16 %v398
  %v420 = vunpack.c.l.b16 %v399
  %v421 = vunpack.c.l.b16 %v400
  %v422 = vunpack.c.l.b16 %v401
  %v423 = vunpack.c.l.b16 %v402
  %v424 = vunpack.c.l.b16 %v403
  %v425 = vunpack.c.l.b16 %v404
  %v426 = vpack.c.b16 %v420, %v419
  %v427 = vpack.c.b16 %v422, %v421
  %v428 = vpack.c.b16 %v424, %v423
  %v429 = vpack.c.b16 %v425, %v425
  %v434 = vsel %vm198, %v397, 0
  %v437 = vsel %vm202, %v429, 0
  %439 = vmatprep.subr.bf16.mxu0 0
  %440 = vmatpush1.bf16.msra.mxu0 %v426
  %441 = vmatprep.subr.bf16.mxu0 0
  %442 = vmatpush1.bf16.msra.mxu0 %v427
  %443 = vmatprep.subr.bf16.mxu0 0
  %444 = vmatpush1.bf16.msra.mxu0 %v428
  %445 = vmatprep.subr.bf16.mxu0 0
  %446 = vmatpush1.bf16.msra.mxu0 %v437
  %447 = vmatprep.subr.bf16.mxu0 0
  %448 = vmatpush1.bf16.msra.mxu0 0
  %449 = vmatprep.subr.bf16.mxu0 0
  %450 = vmatpush1.bf16.msra.mxu0 0
  %451 = vmatprep.subr.bf16.mxu0 0
  %452 = vmatpush1.bf16.msra.mxu0 0
  %453 = vmatprep.subr.bf16.mxu0 0
  %454 = vmatpush1.bf16.msra.mxu0 0
  %455 = vmatprep.subr.bf16.mxu0 0
  %456 = vmatpush1.bf16.msra.mxu0 0
  %457 = vmatprep.subr.bf16.mxu0 0
  %458 = vmatpush1.bf16.msra.mxu0 0
  %459 = vmatprep.subr.bf16.mxu0 0
  %460 = vmatpush1.bf16.msra.mxu0 0
  %461 = vmatprep.subr.bf16.mxu0 0
  %462 = vmatpush1.bf16.msra.mxu0 0
  %463 = vmatprep.subr.bf16.mxu0 0
  %464 = vmatpush1.bf16.msra.mxu0 0
  %465 = vmatprep.subr.bf16.mxu0 0
  %466 = vmatpush1.bf16.msra.mxu0 0
  %467 = vmatprep.subr.bf16.mxu0 0
  %468 = vmatpush1.bf16.msra.mxu0 0
  %469 = vmatprep.subr.bf16.mxu0 0
  %470 = vmatpush1.bf16.msra.mxu0 0
  %471 = vmatprep.mubr.bf16.mxu0 0
  %472 = vmatmul.mubr.bf16.gmra.mrb[0].mxu0 %v434
  %v473 = vpop.f32.mrb[0].mxu0
  %v474 = vadd.f32 %v410, %v473
  %v475 = vpop.f32.mrb[0].mxu0
  %v476 = vpop.f32.mrb[0].mxu0
  %v477 = vpop.f32.mrb[0].mxu0
  %478 = vdwg.mxu0
  %vm479 = vcmp.gt.f32.partialorder %v474, 0.0
  %v480 = vmul.f32 %v474, 1.442695
  %v481 = vpow.pop %v480
  %v482 = vsub.f32 %v481, 1.0
  %v483 = vsel %vm479, %v474, %v482
  %v484 = vpack.c.bf16 %v483, %v483
  %v485 = vld [vmem:[%s9] sm:$0xf]
  %v486 = vld [vmem:[%s9 + $0x4] sm:$0xf]
  %v487 = vld [vmem:[%s9 + $0x8] sm:$0xf]
  %v488 = vld [vmem:[%s9 + $0xc] sm:$0xf]
  %v489 = vld [vmem:[%s9 + $0x10] sm:$0xf]
  %v490 = vld [vmem:[%s9 + $0x14] sm:$0xf]
  %v491 = vld [vmem:[%s9 + $0x18] sm:$0xf]
  %v492 = vld [vmem:[%s9 + $0x1c] sm:$0xf]
  %v493 = vld [vmem:[%s9 + $0x20] sm:$0xf]
  %v494 = vld [vmem:[%s9 + $0x24] sm:$0xf]
  %v495 = vld [vmem:[%s9 + $0x28] sm:$0xf]
  %v496 = vld [vmem:[%s9 + $0x2c] sm:$0xf]
  %v497 = vld [vmem:[%s9 + $0x30] sm:$0x3]
  %v498 = vld [vmem:[%s10] sm:$0x1]
  %v500 = vlaneseq
  %v501 = vshrl.u32 %v500, 7
  %v502 = vsub.s32 0, %v501
  %v503 = vrot.slane %v498, %v502
  %v518 = vunpack.c.l.b16 %v485
  %v519 = vunpack.c.l.b16 %v486
  %v520 = vunpack.c.l.b16 %v487
  %v521 = vunpack.c.l.b16 %v488
  %v522 = vunpack.c.l.b16 %v489
  %v523 = vunpack.c.l.b16 %v490
  %v524 = vunpack.c.l.b16 %v491
  %v525 = vunpack.c.l.b16 %v492
  %v526 = vunpack.c.l.b16 %v493
  %v527 = vunpack.c.l.b16 %v494
  %v528 = vunpack.c.l.b16 %v495
  %v529 = vunpack.c.l.b16 %v496
  %v530 = vunpack.c.l.b16 %v497
  %v531 = vpack.c.b16 %v519, %v518
  %v532 = vpack.c.b16 %v521, %v520
  %v533 = vpack.c.b16 %v523, %v522
  %v534 = vpack.c.b16 %v525, %v524
  %v535 = vpack.c.b16 %v527, %v526
  %v536 = vpack.c.b16 %v529, %v528
  %v537 = vpack.c.b16 %v530, %v530
  %v545 = vsel %vm266, %v484, 0
  %v548 = vsel %vm353, %v537, 0
  %550 = vmatprep.subr.bf16.mxu0 0
  %551 = vmatpush1.bf16.msra.mxu0 %v531
  %552 = vmatprep.subr.bf16.mxu0 0
  %553 = vmatpush1.bf16.msra.mxu0 %v532
  %554 = vmatprep.subr.bf16.mxu0 0
  %555 = vmatpush1.bf16.msra.mxu0 %v533
  %556 = vmatprep.subr.bf16.mxu0 0
  %557 = vmatpush1.bf16.msra.mxu0 %v534
  %558 = vmatprep.subr.bf16.mxu0 0
  %559 = vmatpush1.bf16.msra.mxu0 %v535
  %560 = vmatprep.subr.bf16.mxu0 0
  %561 = vmatpush1.bf16.msra.mxu0 %v536
  %562 = vmatprep.subr.bf16.mxu0 0
  %563 = vmatpush1.bf16.msra.mxu0 %v548
  %564 = vmatprep.subr.bf16.mxu0 0
  %565 = vmatpush1.bf16.msra.mxu0 0
  %566 = vmatprep.subr.bf16.mxu0 0
  %567 = vmatpush1.bf16.msra.mxu0 0
  %568 = vmatprep.subr.bf16.mxu0 0
  %569 = vmatpush1.bf16.msra.mxu0 0
  %570 = vmatprep.subr.bf16.mxu0 0
  %571 = vmatpush1.bf16.msra.mxu0 0
  %572 = vmatprep.subr.bf16.mxu0 0
  %573 = vmatpush1.bf16.msra.mxu0 0
  %574 = vmatprep.subr.bf16.mxu0 0
  %575 = vmatpush1.bf16.msra.mxu0 0
  %576 = vmatprep.subr.bf16.mxu0 0
  %577 = vmatpush1.bf16.msra.mxu0 0
  %578 = vmatprep.subr.bf16.mxu0 0
  %579 = vmatpush1.bf16.msra.mxu0 0
  %580 = vmatprep.subr.bf16.mxu0 0
  %581 = vmatpush1.bf16.msra.mxu0 0
  %582 = vmatprep.mubr.bf16.mxu0 0
  %583 = vmatmul.mubr.bf16.gmra.mrb[0].mxu0 %v545
  %v584 = vpop.f32.mrb[0].mxu0
  %v585 = vadd.f32 %v503, %v584
  %v586 = vpop.f32.mrb[0].mxu0
  %v587 = vpop.f32.mrb[0].mxu0
  %v588 = vpop.f32.mrb[0].mxu0
  %589 = vdwg.mxu0
  %vm590 = vcmp.gt.f32.partialorder %v585, 0.0
  %v591 = vmul.f32 %v585, 1.442695
  %v592 = vpow.pop %v591
  %v593 = vsub.f32 %v592, 1.0
  %v594 = vsel %vm590, %v585, %v593
  %v595 = vpack.c.bf16 %v594, %v594
  %v596 = vld [vmem:[%s11] sm:$0xf]
  %v597 = vld [vmem:[%s11 + $0x4] sm:$0xf]
  %v598 = vld [vmem:[%s11 + $0x8] sm:$0xf]
  %v599 = vld [vmem:[%s11 + $0xc] sm:$0xf]
  %v600 = vld [vmem:[%s11 + $0x10] sm:$0xf]
  %v601 = vld [vmem:[%s11 + $0x14] sm:$0xf]
  %v602 = vld [vmem:[%s11 + $0x18] sm:$0xf]
  %v603 = vld [vmem:[%s11 + $0x1c] sm:$0xf]
  %v604 = vld [vmem:[%s11 + $0x20] sm:$0xf]
  %v605 = vld [vmem:[%s11 + $0x24] sm:$0xf]
  %v606 = vld [vmem:[%s11 + $0x28] sm:$0xf]
  %v607 = vld [vmem:[%s11 + $0x2c] sm:$0xf]
  %v608 = vld [vmem:[%s11 + $0x30] sm:$0x3]
  %v609 = vld [vmem:[%s12] sm:$0x1]
  %v611 = vlaneseq
  %v612 = vshrl.u32 %v611, 7
  %v613 = vsub.s32 0, %v612
  %v614 = vrot.slane %v609, %v613
  %v629 = vunpack.c.l.b16 %v596
  %v630 = vunpack.c.l.b16 %v597
  %v631 = vunpack.c.l.b16 %v598
  %v632 = vunpack.c.l.b16 %v599
  %v633 = vunpack.c.l.b16 %v600
  %v634 = vunpack.c.l.b16 %v601
  %v635 = vunpack.c.l.b16 %v602
  %v636 = vunpack.c.l.b16 %v603
  %v637 = vunpack.c.l.b16 %v604
  %v638 = vunpack.c.l.b16 %v605
  %v639 = vunpack.c.l.b16 %v606
  %v640 = vunpack.c.l.b16 %v607
  %v641 = vunpack.c.l.b16 %v608
  %v642 = vpack.c.b16 %v630, %v629
  %v643 = vpack.c.b16 %v632, %v631
  %v644 = vpack.c.b16 %v634, %v633
  %v645 = vpack.c.b16 %v636, %v635
  %v646 = vpack.c.b16 %v638, %v637
  %v647 = vpack.c.b16 %v640, %v639
  %v648 = vpack.c.b16 %v641, %v641
  %v656 = vsel %vm266, %v595, 0
  %v659 = vsel %vm353, %v648, 0
  %661 = vmatprep.subr.bf16.mxu0 0
  %662 = vmatpush1.bf16.msra.mxu0 %v642
  %663 = vmatprep.subr.bf16.mxu0 0
  %664 = vmatpush1.bf16.msra.mxu0 %v643
  %665 = vmatprep.subr.bf16.mxu0 0
  %666 = vmatpush1.bf16.msra.mxu0 %v644
  %667 = vmatprep.subr.bf16.mxu0 0
  %668 = vmatpush1.bf16.msra.mxu0 %v645
  %669 = vmatprep.subr.bf16.mxu0 0
  %670 = vmatpush1.bf16.msra.mxu0 %v646
  %671 = vmatprep.subr.bf16.mxu0 0
  %672 = vmatpush1.bf16.msra.mxu0 %v647
  %673 = vmatprep.subr.bf16.mxu0 0
  %674 = vmatpush1.bf16.msra.mxu0 %v659
  %675 = vmatprep.subr.bf16.mxu0 0
  %676 = vmatpush1.bf16.msra.mxu0 0
  %677 = vmatprep.subr.bf16.mxu0 0
  %678 = vmatpush1.bf16.msra.mxu0 0
  %679 = vmatprep.subr.bf16.mxu0 0
  %680 = vmatpush1.bf16.msra.mxu0 0
  %681 = vmatprep.subr.bf16.mxu0 0
  %682 = vmatpush1.bf16.msra.mxu0 0
  %683 = vmatprep.subr.bf16.mxu0 0
  %684 = vmatpush1.bf16.msra.mxu0 0
  %685 = vmatprep.subr.bf16.mxu0 0
  %686 = vmatpush1.bf16.msra.mxu0 0
  %687 = vmatprep.subr.bf16.mxu0 0
  %688 = vmatpush1.bf16.msra.mxu0 0
  %689 = vmatprep.subr.bf16.mxu0 0
  %690 = vmatpush1.bf16.msra.mxu0 0
  %691 = vmatprep.subr.bf16.mxu0 0
  %692 = vmatpush1.bf16.msra.mxu0 0
  %693 = vmatprep.mubr.bf16.mxu0 0
  %694 = vmatmul.mubr.bf16.gmra.mrb[0].mxu0 %v656
  %v695 = vpop.f32.mrb[0].mxu0
  %v696 = vadd.f32 %v614, %v695
  %v697 = vpop.f32.mrb[0].mxu0
  %v698 = vpop.f32.mrb[0].mxu0
  %v699 = vpop.f32.mrb[0].mxu0
  %700 = vdwg.mxu0
  %vm701 = vcmp.gt.f32.partialorder %v696, 0.0
  %v702 = vmul.f32 %v696, 1.442695
  %v703 = vpow.pop %v702
  %v704 = vsub.f32 %v703, 1.0
  %v705 = vsel %vm701, %v696, %v704
  %v706 = vpack.c.bf16 %v705, %v705
  %v707 = vld [vmem:[%s13] sm:$0xf]
  %v708 = vld [vmem:[%s13 + $0x4] sm:$0xf]
  %v709 = vld [vmem:[%s13 + $0x8] sm:$0xf]
  %v710 = vld [vmem:[%s13 + $0xc] sm:$0xf]
  %v711 = vld [vmem:[%s13 + $0x10] sm:$0xf]
  %v712 = vld [vmem:[%s13 + $0x14] sm:$0xf]
  %v713 = vld [vmem:[%s13 + $0x18] sm:$0x1]
  %v714 = vld [vmem:[#allocation2] sm:$0x1]
  %v716 = vlaneseq
  %v717 = vshrl.u32 %v716, 7
  %v718 = vsub.s32 0, %v717
  %v719 = vrot.slane %v714, %v718
  %v728 = vunpack.c.l.b16 %v707
  %v729 = vunpack.c.l.b16 %v708
  %v730 = vunpack.c.l.b16 %v709
  %v731 = vunpack.c.l.b16 %v710
  %v732 = vunpack.c.l.b16 %v711
  %v733 = vunpack.c.l.b16 %v712
  %v734 = vunpack.c.l.b16 %v713
  %v735 = vpack.c.b16 %v729, %v728
  %v736 = vpack.c.b16 %v731, %v730
  %v737 = vpack.c.b16 %v733, %v732
  %v738 = vpack.c.b16 %v734, %v734
  %v743 = vsel %vm198, %v706, 0
  %v746 = vsel %vm202, %v738, 0
  %748 = vmatprep.subr.bf16.mxu0 0
  %749 = vmatpush1.bf16.msra.mxu0 %v735
  %750 = vmatprep.subr.bf16.mxu0 0
  %751 = vmatpush1.bf16.msra.mxu0 %v736
  %752 = vmatprep.subr.bf16.mxu0 0
  %753 = vmatpush1.bf16.msra.mxu0 %v737
  %754 = vmatprep.subr.bf16.mxu0 0
  %755 = vmatpush1.bf16.msra.mxu0 %v746
  %756 = vmatprep.subr.bf16.mxu0 0
  %757 = vmatpush1.bf16.msra.mxu0 0
  %758 = vmatprep.subr.bf16.mxu0 0
  %759 = vmatpush1.bf16.msra.mxu0 0
  %760 = vmatprep.subr.bf16.mxu0 0
  %761 = vmatpush1.bf16.msra.mxu0 0
  %762 = vmatprep.subr.bf16.mxu0 0
  %763 = vmatpush1.bf16.msra.mxu0 0
  %764 = vmatprep.subr.bf16.mxu0 0
  %765 = vmatpush1.bf16.msra.mxu0 0
  %766 = vmatprep.subr.bf16.mxu0 0
  %767 = vmatpush1.bf16.msra.mxu0 0
  %768 = vmatprep.subr.bf16.mxu0 0
  %769 = vmatpush1.bf16.msra.mxu0 0
  %770 = vmatprep.subr.bf16.mxu0 0
  %771 = vmatpush1.bf16.msra.mxu0 0
  %772 = vmatprep.subr.bf16.mxu0 0
  %773 = vmatpush1.bf16.msra.mxu0 0
  %774 = vmatprep.subr.bf16.mxu0 0
  %775 = vmatpush1.bf16.msra.mxu0 0
  %776 = vmatprep.subr.bf16.mxu0 0
  %777 = vmatpush1.bf16.msra.mxu0 0
  %778 = vmatprep.subr.bf16.mxu0 0
  %779 = vmatpush1.bf16.msra.mxu0 0
  %780 = vmatprep.mubr.bf16.mxu0 0
  %781 = vmatmul.mubr.bf16.gmra.mrb[0].mxu0 %v743
  %v782 = vpop.f32.mrb[0].mxu0
  %v783 = vadd.f32 %v719, %v782
  %v784 = vpop.f32.mrb[0].mxu0
  %v785 = vpop.f32.mrb[0].mxu0
  %v786 = vpop.f32.mrb[0].mxu0
  %787 = vdwg.mxu0
  %vm788 = vcmask 1024
  %789 = vst.msk [vmem:[%s15] sm:$0x3] %vm788, %v783
  // Predicated region
  $region62: #{tpu_custom_call.1} parent=0 // pred_check
    _
  $region63: #{tpu_custom_call.1} parent=0 // pred_check_branch
    %791 = sbr.rel (0) target = $region65
  $region64: #{tpu_custom_call.1} parent=0 // pred_region
    _
  $region65: #{tpu_custom_call.1} parent=0 // pred_fallthru
    _
  // Predicated region
  $region66: #{tpu_custom_call.1} parent=0 // pred_check
    _
  $region67: #{tpu_custom_call.1} parent=0 // pred_check_branch
    %793 = sbr.rel (0) target = $region69
  $region68: #{tpu_custom_call.1} parent=0 // pred_region
    _
  $region69: #{tpu_custom_call.1} parent=0 // pred_fallthru
    _

</llo_original>
